<compile_context>
chip_gen: v7x
topology: tpu7x:2x2x1
jax: 0.10.0
libtpu: 0.0.40
codegen_flags: <defaults>
</compile_context>

<pallas_src>
import jax
import jax.numpy as jnp
from jax.experimental import pallas as pl
from jax.experimental.pallas import tpu as pltpu


def _round_up(x, m):
    return (x + m - 1) // m * m


def _pick_tile(padded_total, desired, align):
    """Largest multiple of `align` that divides `padded_total` and is <= desired."""
    if padded_total <= desired:
        return padded_total
    best = align
    t = align
    while t <= desired:
        if padded_total % t == 0:
            best = t
        t += align
    return best


def lora_kernel(x_ref, w_ref, bias_ref, xa_ref, b_ref, o_ref, acc_ref):
    k = pl.program_id(2)
    nk = pl.num_programs(2)

    # ---- frozen-linear path: accumulate x_tile @ W^T[k-tile, j-tile] in f32 --
    @pl.when(k == 0)
    def _():
        acc_ref[...] = jnp.zeros_like(acc_ref)

    acc_ref[...] += jnp.dot(x_ref[...], w_ref[...],
                            preferred_element_type=jnp.float32)

    # ---- finalize once per (i, j): LoRA B matmul + bias, cast, store --------
    # xa_ref = (x @ A^T) precomputed in the wrapper; its block index depends
    # only on i, so it is not re-fetched across j/k.
    @pl.when(k == nk - 1)
    def _():
        upd = jnp.dot(xa_ref[...], b_ref[...],
                      preferred_element_type=jnp.float32)          # (tm, tn)
        o_ref[...] = (acc_ref[...] + upd + bias_ref[...]).astype(o_ref.dtype)


def prepare_lora_weights(W, bias, A, B, *, compute_dtype=jnp.bfloat16):
    """One-time relayout of the frozen/LoRA weights to lane-major padded [K, N]
    layouts.  Call once at init; reuse the returned dict for every forward."""
    out_f, in_f = W.shape
    rank = A.shape[0]
    in_pad = _round_up(in_f, 128)
    out_pad = _round_up(out_f, 128)
    r_pad = _round_up(rank, 128)

    w_t = jnp.pad(W.T.astype(compute_dtype),
                  ((0, in_pad - in_f), (0, out_pad - out_f)))       # [in, out]
    a_t = jnp.pad(A.T.astype(compute_dtype),
                  ((0, in_pad - in_f), (0, r_pad - rank)))          # [in, r]
    b_t = jnp.pad(B.T.astype(compute_dtype),
                  ((0, r_pad - rank), (0, out_pad - out_f)))        # [r, out]
    bias_p = jnp.pad(bias.astype(jnp.float32).reshape(1, out_f),
                     ((0, 0), (0, out_pad - out_f)))                # f32, added once

    return dict(w_t=w_t, a_t=a_t, b_t=b_t, bias_p=bias_p,
                in_f=in_f, out_f=out_f, rank=rank,
                in_pad=in_pad, out_pad=out_pad, r_pad=r_pad,
                compute_dtype=compute_dtype)


def lora_forward(x, params, *, tm=512, tn=1024, tk=1024):
    """x: (batch, seq, in_f).  `params` from prepare_lora_weights (cached)."""
    batch, seq, in_f = x.shape
    assert in_f == params["in_f"]
    out_f = params["out_f"]
    in_pad, out_pad, r_pad = params["in_pad"], params["out_pad"], params["r_pad"]
    cdt = params["compute_dtype"]
    out_dtype = x.dtype
    M = batch * seq

    # ---- tiles: lane-dense divisors of the padded dims; 16-row sublane align -
    tm = min(tm, _round_up(M, 16))
    tn = _pick_tile(out_pad, tn, 128)
    tk = _pick_tile(in_pad, tk, 128)
    m_pad = _round_up(M, tm)

    # ---- per-call activation prep (weights are already laid out) ------------
    x_p = jnp.pad(x.reshape(M, in_f).astype(cdt),
                  ((0, m_pad - M), (0, in_pad - in_f)))
    # LoRA A path hoisted out of the kernel entirely (tiny: 2*M*in*r flops).
    # Note: the f32 xa result is rounded to compute_dtype before the B matmul,
    # matching the in-kernel bf16 MXU path (slightly different rounding than a
    # pure-f32 reference; exact when compute_dtype == float32).
    xa = jnp.dot(x_p, params["a_t"],
                 preferred_element_type=jnp.float32).astype(cdt)    # (m_pad, r_pad)

    grid = (m_pad // tm, out_pad // tn, in_pad // tk)

    # ---- VMEM budget (double-buffered tiles + f32 accumulator) --------------
    cbytes = jnp.dtype(cdt).itemsize
    obytes = jnp.dtype(out_dtype).itemsize
    vmem_needed = (2 * (tm * tk + tk * tn + tm * r_pad + r_pad * tn) * cbytes
                   + 2 * tn * 4                    # bias (f32)
                   + 2 * tm * tn * obytes          # output tiles
                   + tm * tn * 4)                  # f32 accumulator scratch
    vmem_limit = int(min(max(int(1.5 * vmem_needed), 1 << 20), 48 << 20))

    cost = pl.CostEstimate(
        flops=2 * M * in_pad * out_pad + 2 * M * r_pad * out_pad,
        transcendentals=0,
        bytes_accessed=((m_pad * in_pad + in_pad * out_pad
                         + m_pad * r_pad + r_pad * out_pad) * cbytes
                        + out_pad * 4 + m_pad * out_pad * obytes),
    )

    out_p = pl.pallas_call(
        lora_kernel,
        out_shape=jax.ShapeDtypeStruct((m_pad, out_pad), out_dtype),
        grid=grid,
        in_specs=[
            pl.BlockSpec((tm, tk), lambda i, j, k: (i, k)),       # x
            pl.BlockSpec((tk, tn), lambda i, j, k: (k, j)),       # W^T
            pl.BlockSpec((1, tn), lambda i, j, k: (0, j)),        # bias (f32)
            pl.BlockSpec((tm, r_pad), lambda i, j, k: (i, 0)),    # xa = x @ A^T
            pl.BlockSpec((r_pad, tn), lambda i, j, k: (0, j)),    # B^T
        ],
        out_specs=pl.BlockSpec((tm, tn), lambda i, j, k: (i, j)),
        scratch_shapes=[pltpu.VMEM((tm, tn), jnp.float32)],
        compiler_params=pltpu.CompilerParams(
            # No cross-j state anymore -> both M and N shard across TCs (v7x);
            # K is the reduction axis.
            dimension_semantics=("parallel", "parallel", "arbitrary"),
            vmem_limit_bytes=vmem_limit,
        ),
        cost_estimate=cost,
    )(x_p, params["w_t"], params["bias_p"], xa, params["b_t"])

    return out_p[:M, :out_f].reshape(batch, seq, out_f)


# --------------------------------------------------------------------------- #
# Test harness
# --------------------------------------------------------------------------- #
def _xavier_uniform(key, shape):
    fan_out, fan_in = shape
    limit = (6.0 / (fan_in + fan_out)) ** 0.5
    return jax.random.uniform(key, shape, jnp.float32, -limit, limit)


def _mirrored_ref(x, W, bias, A, B, cdt):
    """Reference that mirrors the kernel's bf16-input / f32-accumulate path."""
    f32 = jnp.float32
    xc = x.astype(cdt).astype(f32)
    Wc = W.astype(cdt).astype(f32)
    Ac = A.astype(cdt).astype(f32)
    Bc = B.astype(cdt).astype(f32)
    base = xc @ Wc.T + bias
    xa = (xc @ Ac.T).astype(cdt).astype(f32)
    return base + xa @ Bc.T


def _run_case(key, batch, seq, in_f, out_f, rank, compute_dtype, **tiles):
    kx, kw, kb, ka, kbb = jax.random.split(key, 5)
    x = jax.random.normal(kx, (batch, seq, in_f), jnp.float32)
    W = _xavier_uniform(kw, (out_f, in_f))            # original_layer.weight
    bias = jax.random.normal(kb, (out_f,), jnp.float32) * 0.01
    A = _xavier_uniform(ka, (rank, in_f))             # LoRA A
    B = _xavier_uniform(kbb, (out_f, rank))           # LoRA B

    # Frozen weights: relayout ONCE, reuse across calls.
    params = prepare_lora_weights(W, bias, A, B, compute_dtype=compute_dtype)

    out = lora_forward(x, params, **tiles)
    jax.block_until_ready(out)
    assert out.shape == (batch, seq, out_f)

    # Exact f32 module semantics.
    ref_f32 = x @ W.T + bias + (x @ A.T) @ B.T

    if compute_dtype == jnp.float32:
        assert jnp.allclose(out, ref_f32, atol=1e-4, rtol=1e-4), "f32 mismatch"
    else:
        # Tight check vs a reference that mirrors the bf16 MXU path.
        ref_m = _mirrored_ref(x, W, bias, A, B, compute_dtype)
        assert jnp.allclose(out.astype(jnp.float32), ref_m,
                            atol=1e-2, rtol=1e-2), "bf16-path mismatch"
        # Loose sanity check vs the exact module semantics.
        assert jnp.allclose(out, ref_f32, atol=1e-1, rtol=1e-1), "semantic drift"


if __name__ == "__main__":
    key = jax.random.PRNGKey(0)
    k1, k2 = jax.random.split(key)

    # Small shapes consistent with the module: nn.Linear(32, 32), rank=8.
    # f32 compute path: bit-for-bit the nn.Linear + LoRA semantics.
    _run_case(k1, batch=2, seq=8, in_f=32, out_f=32, rank=8,
              compute_dtype=jnp.float32)

    # Larger case exercising a real multi-tile (M, N, K) grid with the default
    # bf16 MXU path (f32 accumulation), 256-multiple tn/tk for full MXU width.
    _run_case(k2, batch=2, seq=64, in_f=256, out_f=256, rank=8,
              compute_dtype=jnp.bfloat16, tm=128, tn=256, tk=256)

    print("KERNEL_OK")
</pallas_src>

<mosaic_0001>
module attributes {stable_mosaic.version = 11 : i64} {
  func.func @lora_kernel(%arg0: i32, %arg1: i32, %arg2: i32, %arg3: memref<16x128xf32, #tpu.memory_space<vmem>>, %arg4: memref<128x128xf32, #tpu.memory_space<vmem>>, %arg5: memref<1x128xf32, #tpu.memory_space<vmem>>, %arg6: memref<16x128xf32, #tpu.memory_space<vmem>>, %arg7: memref<128x128xf32, #tpu.memory_space<vmem>>, %arg8: memref<16x128xf32, #tpu.memory_space<vmem>>, %arg9: memref<16x128xf32, #tpu.memory_space<vmem>>) attributes {dimension_semantics = [#tpu.dimension_semantics<parallel>, #tpu.dimension_semantics<parallel>, #tpu.dimension_semantics<arbitrary>], iteration_bounds = array<i64: 1, 1, 1>, scalar_prefetch = 0 : i64, scratch_operands = 1 : i64, tpu.core_type = #tpu.core_type<tc>, window_params = [{transform_indices = @transform_0, window_bounds = array<i64: 16, 128>}, {transform_indices = @transform_1, window_bounds = array<i64: 128, 128>}, {transform_indices = @transform_2, window_bounds = array<i64: 1, 128>}, {transform_indices = @transform_3, window_bounds = array<i64: 16, 128>}, {transform_indices = @transform_4, window_bounds = array<i64: 128, 128>}, {transform_indices = @transform_5, window_bounds = array<i64: 16, 128>}]} {
    %c0_i32 = arith.constant 0 : i32
    %0 = arith.cmpi eq, %arg2, %c0_i32 : i32
    %1 = arith.extui %0 : i1 to i32
    %c0_i32_0 = arith.constant 0 : i32
    %2 = arith.cmpi ne, %1, %c0_i32_0 : i32
    scf.if %2 {
      %cst_10 = arith.constant 0.000000e+00 : f32
      %12 = vector.broadcast %cst_10 : f32 to vector<16x128xf32>
      %c0_11 = arith.constant 0 : index
      %c0_12 = arith.constant 0 : index
      %13 = vector.load %arg9[%c0_11, %c0_12] : memref<16x128xf32, #tpu.memory_space<vmem>>, vector<16x128xf32>
      tpu.vector_store %arg9[%c0_11, %c0_12], %12 {strides = array<i32>} : memref<16x128xf32, #tpu.memory_space<vmem>>, vector<16x128xf32>,
    } else {
    }
    %c0 = arith.constant 0 : index
    %c0_1 = arith.constant 0 : index
    %3 = vector.load %arg9[%c0, %c0_1] : memref<16x128xf32, #tpu.memory_space<vmem>>, vector<16x128xf32>
    %c0_2 = arith.constant 0 : index
    %c0_3 = arith.constant 0 : index
    %4 = vector.load %arg3[%c0_2, %c0_3] : memref<16x128xf32, #tpu.memory_space<vmem>>, vector<16x128xf32>
    %c0_4 = arith.constant 0 : index
    %c0_5 = arith.constant 0 : index
    %5 = vector.load %arg4[%c0_4, %c0_5] : memref<128x128xf32, #tpu.memory_space<vmem>>, vector<128x128xf32>
    %cst = arith.constant dense<0.000000e+00> : vector<16x128xf32>
    %6 = tpu.matmul %4, %5, %cst {dimension_numbers = #tpu.dot_dimension_numbers<[1], [0], [0], [1], [0, 0, 1, 1], [], []>} : vector<16x128xf32>, vector<128x128xf32>, vector<16x128xf32> -> vector<16x128xf32>
    %7 = arith.addf %3, %6 : vector<16x128xf32>
    %c0_6 = arith.constant 0 : index
    %c0_7 = arith.constant 0 : index
    %8 = vector.load %arg9[%c0_6, %c0_7] : memref<16x128xf32, #tpu.memory_space<vmem>>, vector<16x128xf32>
    tpu.vector_store %arg9[%c0_6, %c0_7], %7 {strides = array<i32>} : memref<16x128xf32, #tpu.memory_space<vmem>>, vector<16x128xf32>,
    %c0_i32_8 = arith.constant 0 : i32
    %9 = arith.cmpi eq, %arg2, %c0_i32_8 : i32
    %10 = arith.extui %9 : i1 to i32
    %c0_i32_9 = arith.constant 0 : i32
    %11 = arith.cmpi ne, %10, %c0_i32_9 : i32
    scf.if %11 {
      %c0_10 = arith.constant 0 : index
      %c0_11 = arith.constant 0 : index
      %12 = vector.load %arg6[%c0_10, %c0_11] : memref<16x128xf32, #tpu.memory_space<vmem>>, vector<16x128xf32>
      %c0_12 = arith.constant 0 : index
      %c0_13 = arith.constant 0 : index
      %13 = vector.load %arg7[%c0_12, %c0_13] : memref<128x128xf32, #tpu.memory_space<vmem>>, vector<128x128xf32>
      %cst_14 = arith.constant dense<0.000000e+00> : vector<16x128xf32>
      %14 = tpu.matmul %12, %13, %cst_14 {dimension_numbers = #tpu.dot_dimension_numbers<[1], [0], [0], [1], [0, 0, 1, 1], [], []>} : vector<16x128xf32>, vector<128x128xf32>, vector<16x128xf32> -> vector<16x128xf32>
      %c0_15 = arith.constant 0 : index
      %c0_16 = arith.constant 0 : index
      %15 = vector.load %arg9[%c0_15, %c0_16] : memref<16x128xf32, #tpu.memory_space<vmem>>, vector<16x128xf32>
      %16 = arith.addf %15, %14 : vector<16x128xf32>
      %c0_17 = arith.constant 0 : index
      %c0_18 = arith.constant 0 : index
      %17 = vector.load %arg5[%c0_17, %c0_18] : memref<1x128xf32, #tpu.memory_space<vmem>>, vector<1x128xf32>
      %18 = vector.broadcast %17 : vector<1x128xf32> to vector<16x128xf32>
      %19 = arith.addf %16, %18 : vector<16x128xf32>
      %c0_19 = arith.constant 0 : index
      %c0_20 = arith.constant 0 : index
      %20 = vector.load %arg8[%c0_19, %c0_20] : memref<16x128xf32, #tpu.memory_space<vmem>>, vector<16x128xf32>
      tpu.vector_store %arg8[%c0_19, %c0_20], %19 {strides = array<i32>} : memref<16x128xf32, #tpu.memory_space<vmem>>, vector<16x128xf32>,
    } else {
    }
    return
  }
  func.func @transform_0(%arg0: i32, %arg1: i32, %arg2: i32) -> (i32, i32) {
    %c0_i32 = arith.constant 0 : i32
    return %arg0, %arg2 : i32, i32
  }
  func.func @transform_1(%arg0: i32, %arg1: i32, %arg2: i32) -> (i32, i32) {
    %c0_i32 = arith.constant 0 : i32
    return %arg2, %arg1 : i32, i32
  }
  func.func @transform_2(%arg0: i32, %arg1: i32, %arg2: i32) -> (i32, i32) {
    %c0_i32 = arith.constant 0 : i32
    %c0_i32_0 = arith.constant 0 : i32
    return %c0_i32, %arg1 : i32, i32
  }
  func.func @transform_3(%arg0: i32, %arg1: i32, %arg2: i32) -> (i32, i32) {
    %c0_i32 = arith.constant 0 : i32
    %c0_i32_0 = arith.constant 0 : i32
    return %arg0, %c0_i32 : i32, i32
  }
  func.func @transform_4(%arg0: i32, %arg1: i32, %arg2: i32) -> (i32, i32) {
    %c0_i32 = arith.constant 0 : i32
    %c0_i32_0 = arith.constant 0 : i32
    return %c0_i32, %arg1 : i32, i32
  }
  func.func @transform_5(%arg0: i32, %arg1: i32, %arg2: i32) -> (i32, i32) {
    %c0_i32 = arith.constant 0 : i32
    return %arg0, %arg1 : i32, i32
  }
}

</mosaic_0001>

<llo_original>
// kernel: tpu_custom_call.1
$region0: #{tpu_custom_call.1}
  #allocation0 [shape = 'u32[]', space=smem, size = 0x4, offset = 0x4, fixed_abs, tag = 'smem constant byte address 0x4 - core index']
  #allocation1 [shape = 'u32[144,128]{1,0:T(1,128)}', space=vmem, size = 0x12000, scoped, tag = 'internal scratch']
  #allocation2 [shape = 'f32[16,128]{1,0:T(8,128)}', space=vmem, size = 0x2000, scoped, tag = 'scratch operand']
  %s0 = inlined_call_operand.hbm [shape: f32[16,128], index: 0, kind: input, shape index: {}]
  %s1 = inlined_call_operand.hbm [shape: f32[128,128], index: 1, kind: input, shape index: {}]
  %s2 = inlined_call_operand.vmem [shape: f32[1,128], index: 2, kind: input, shape index: {}]
  %s3 = inlined_call_operand.hbm [shape: f32[16,128], index: 3, kind: input, shape index: {}]
  %s4 = inlined_call_operand.hbm [shape: f32[128,128], index: 4, kind: input, shape index: {}]
  %s5 = inlined_call_operand.hbm [shape: f32[16,128], index: 5, kind: output, shape index: {}]
  %s6 = sld [smem:[#allocation0]]
  $region54: #{tpu_custom_call.1} parent=0
    _
  %s8 = ssub.s32 1, %s6
  %s9 = scalar_select 0, %s8, %s6
  $region1: #{tpu_custom_call.1} parent=0
    #allocation3 [shape = 'u8[8192]{0}', space=vmem, size = 0x2000, scoped, tag = 'input window, operand 0, single buffered']
    #allocation4 [shape = 's32[1]{0}', space=sflag, size = 0x4, scoped, tag = 'scoped memory for tpu_custom_call.1']
    #allocation5 [shape = 's32[1]{0}', space=sflag, size = 0x4, scoped, tag = 'scoped memory for tpu_custom_call.1']
    #allocation6 [shape = 'u8[65536]{0}', space=vmem, size = 0x10000, scoped, tag = 'input window, operand 1, single buffered']
    #allocation7 [shape = 's32[1]{0}', space=sflag, size = 0x4, scoped, tag = 'scoped memory for tpu_custom_call.1']
    #allocation8 [shape = 'u8[8192]{0}', space=vmem, size = 0x2000, scoped, tag = 'input window, operand 3, single buffered']
    #allocation9 [shape = 'u8[65536]{0}', space=vmem, size = 0x10000, scoped, tag = 'input window, operand 4, single buffered']
    #allocation10 [shape = 's32[1]{0}', space=sflag, size = 0x4, scoped, tag = 'scoped memory for tpu_custom_call.1']
    #allocation11 [shape = 'u8[8192]{0}', space=vmem, size = 0x2000, scoped, tag = 'output window, operand 0, single buffered']
    %10 = vsyncpa [#allocation4], 0
    %11 = vsyncpa [#allocation7], 0
    %12 = vsyncpa [#allocation10], 0
    %13 = vsyncpa [#allocation5], 0
    // Predicated region
    $region2: #{tpu_custom_call.1} parent=1 // pred_check
      _
    $region3: #{tpu_custom_call.1} parent=1 // pred_check_branch
      %15 = sbr.rel (0) target = $region5
    $region4: #{tpu_custom_call.1} parent=1 // pred_region
      %s17 = ssub.s32 256, 256
      %18 = vsyncadd [#allocation4], %s17
      %s19 = sshll.u32 [#allocation3], 4
      %s20 = int_to_ptr.vmem [resolvable:$true] %s19
      %25 = dma.hbm_to_vmem [thread:$0]  %s0, 256, %s20, [#allocation4], 128, 128, 8
    $region5: #{tpu_custom_call.1} parent=1 // pred_fallthru
      _
    // Predicated region
    $region6: #{tpu_custom_call.1} parent=1 // pred_check
      _
    $region7: #{tpu_custom_call.1} parent=1 // pred_check_branch
      %27 = sbr.rel (0) target = $region9
    $region8: #{tpu_custom_call.1} parent=1 // pred_region
      %s29 = ssub.s32 2048, 2048
      %30 = vsyncadd [#allocation7], %s29
      %s31 = sshll.u32 [#allocation6], 4
      %s32 = int_to_ptr.vmem [resolvable:$true] %s31
      %37 = dma.hbm_to_vmem [thread:$0]  %s1, 2048, %s32, [#allocation7], 128, 128, 8
    $region9: #{tpu_custom_call.1} parent=1 // pred_fallthru
      _
    // Predicated region
    $region10: #{tpu_custom_call.1} parent=1 // pred_check
      _
    $region11: #{tpu_custom_call.1} parent=1 // pred_check_branch
      %39 = sbr.rel (0) target = $region13
    $region12: #{tpu_custom_call.1} parent=1 // pred_region
      _
    $region13: #{tpu_custom_call.1} parent=1 // pred_fallthru
      _
    // Predicated region
    $region14: #{tpu_custom_call.1} parent=1 // pred_check
      _
    $region15: #{tpu_custom_call.1} parent=1 // pred_check_branch
      %41 = sbr.rel (0) target = $region17
    $region16: #{tpu_custom_call.1} parent=1 // pred_region
      %s43 = ssub.s32 256, 256
      %44 = vsyncadd [#allocation7], %s43
      %s45 = sshll.u32 [#allocation8], 4
      %s46 = int_to_ptr.vmem [resolvable:$true] %s45
      %51 = dma.hbm_to_vmem [thread:$0]  %s3, 256, %s46, [#allocation7], 128, 128, 8
    $region17: #{tpu_custom_call.1} parent=1 // pred_fallthru
      _
    // Predicated region
    $region18: #{tpu_custom_call.1} parent=1 // pred_check
      _
    $region19: #{tpu_custom_call.1} parent=1 // pred_check_branch
      %53 = sbr.rel (0) target = $region21
    $region20: #{tpu_custom_call.1} parent=1 // pred_region
      %s55 = ssub.s32 2048, 2048
      %56 = vsyncadd [#allocation10], %s55
      %s57 = sshll.u32 [#allocation9], 4
      %s58 = int_to_ptr.vmem [resolvable:$true] %s57
      %63 = dma.hbm_to_vmem [thread:$0]  %s4, 2048, %s58, [#allocation10], 128, 128, 8
    $region21: #{tpu_custom_call.1} parent=1 // pred_fallthru
      _
    // Predicated region
    $region22: #{tpu_custom_call.1} parent=1 // pred_check
      _
    $region23: #{tpu_custom_call.1} parent=1 // pred_check_branch
      %65 = sbr.rel (0) target = $region25
    $region24: #{tpu_custom_call.1} parent=1 // pred_region
      %66 = dma.done [#allocation4], 256
    $region25: #{tpu_custom_call.1} parent=1 // pred_fallthru
      _
    // Predicated region
    $region26: #{tpu_custom_call.1} parent=1 // pred_check
      _
    $region27: #{tpu_custom_call.1} parent=1 // pred_check_branch
      %68 = sbr.rel (0) target = $region29
    $region28: #{tpu_custom_call.1} parent=1 // pred_region
      %69 = dma.done [#allocation7], 2048
    $region29: #{tpu_custom_call.1} parent=1 // pred_fallthru
      _
    // Predicated region
    $region30: #{tpu_custom_call.1} parent=1 // pred_check
      _
    $region31: #{tpu_custom_call.1} parent=1 // pred_check_branch
      %71 = sbr.rel (0) target = $region33
    $region32: #{tpu_custom_call.1} parent=1 // pred_region
      %72 = dma.done [#allocation7], 256
    $region33: #{tpu_custom_call.1} parent=1 // pred_fallthru
      _
    // Predicated region
    $region34: #{tpu_custom_call.1} parent=1 // pred_check
      _
    $region35: #{tpu_custom_call.1} parent=1 // pred_check_branch
      %74 = sbr.rel (0) target = $region37
    $region36: #{tpu_custom_call.1} parent=1 // pred_region
      %75 = dma.done [#allocation10], 2048
    $region37: #{tpu_custom_call.1} parent=1 // pred_fallthru
      _
    %p76 = scmp.eq.s32.totalorder 0, 0
    // Predicated region
    $region38: #{tpu_custom_call.1} parent=1 // pred_check
      %p77 = pneg %p76
    $region39: #{tpu_custom_call.1} parent=1 // pred_check_branch
      %79 = sbr.rel (%p77) target = $region41
    $region40: #{tpu_custom_call.1} parent=1 // pred_region
      %80 = vst [vmem:[#allocation2] sm:$0xff] 0.0
      %81 = vst [vmem:[#allocation2 + $0x8] sm:$0xff] 0.0
    $region41: #{tpu_custom_call.1} parent=1 // pred_fallthru
      _
    %v82 = vld [vmem:[#allocation2] sm:$0xff]
    %v83 = vld [vmem:[#allocation2 + $0x8] sm:$0xff]
    %v84 = vld [vmem:[#allocation3] sm:$0xff]
    %v85 = vld [vmem:[#allocation3 + $0x8] sm:$0xff]
    %v86 = vld [vmem:[#allocation6] sm:$0xff]
    %v87 = vld [vmem:[#allocation6 + $0x8] sm:$0xff]
    %v88 = vld [vmem:[#allocation6 + $0x10] sm:$0xff]
    %v89 = vld [vmem:[#allocation6 + $0x18] sm:$0xff]
    %v90 = vld [vmem:[#allocation6 + $0x20] sm:$0xff]
    %v91 = vld [vmem:[#allocation6 + $0x28] sm:$0xff]
    %v92 = vld [vmem:[#allocation6 + $0x30] sm:$0xff]
    %v93 = vld [vmem:[#allocation6 + $0x38] sm:$0xff]
    %v94 = vld [vmem:[#allocation6 + $0x40] sm:$0xff]
    %v95 = vld [vmem:[#allocation6 + $0x48] sm:$0xff]
    %v96 = vld [vmem:[#allocation6 + $0x50] sm:$0xff]
    %v97 = vld [vmem:[#allocation6 + $0x58] sm:$0xff]
    %v98 = vld [vmem:[#allocation6 + $0x60] sm:$0xff]
    %v99 = vld [vmem:[#allocation6 + $0x68] sm:$0xff]
    %v100 = vld [vmem:[#allocation6 + $0x70] sm:$0xff]
    %v101 = vld [vmem:[#allocation6 + $0x78] sm:$0xff]
    %102 = vmatprep.subr.mxu0 0.0
    %103 = vmatpush1.msra.mxu0 %v86
    %104 = vmatprep.subr.mxu0 0.0
    %105 = vmatpush1.msra.mxu0 %v87
    %106 = vmatprep.subr.mxu0 0.0
    %107 = vmatpush1.msra.mxu0 %v88
    %108 = vmatprep.subr.mxu0 0.0
    %109 = vmatpush1.msra.mxu0 %v89
    %110 = vmatprep.subr.mxu0 0.0
    %111 = vmatpush1.msra.mxu0 %v90
    %112 = vmatprep.subr.mxu0 0.0
    %113 = vmatpush1.msra.mxu0 %v91
    %114 = vmatprep.subr.mxu0 0.0
    %115 = vmatpush1.msra.mxu0 %v92
    %116 = vmatprep.subr.mxu0 0.0
    %117 = vmatpush1.msra.mxu0 %v93
    %118 = vmatprep.subr.mxu0 0.0
    %119 = vmatpush1.msra.mxu0 %v94
    %120 = vmatprep.subr.mxu0 0.0
    %121 = vmatpush1.msra.mxu0 %v95
    %122 = vmatprep.subr.mxu0 0.0
    %123 = vmatpush1.msra.mxu0 %v96
    %124 = vmatprep.subr.mxu0 0.0
    %125 = vmatpush1.msra.mxu0 %v97
    %126 = vmatprep.subr.mxu0 0.0
    %127 = vmatpush1.msra.mxu0 %v98
    %128 = vmatprep.subr.mxu0 0.0
    %129 = vmatpush1.msra.mxu0 %v99
    %130 = vmatprep.subr.mxu0 0.0
    %131 = vmatpush1.msra.mxu0 %v100
    %132 = vmatprep.subr.mxu0 0.0
    %133 = vmatpush1.msra.mxu0 %v101
    %134 = vmatprep.subr.mxu0 0.0
    %135 = vmatpush1.msra.mxu0 0.0
    %136 = vmatprep.subr.mxu0 0.0
    %137 = vmatpush1.msra.mxu0 0.0
    %138 = vmatprep.subr.mxu0 0.0
    %139 = vmatpush1.msra.mxu0 0.0
    %140 = vmatprep.subr.mxu0 0.0
    %141 = vmatpush1.msra.mxu0 0.0
    %142 = vmatprep.subr.mxu0 0.0
    %143 = vmatpush1.msra.mxu0 0.0
    %144 = vmatprep.subr.mxu0 0.0
    %145 = vmatpush1.msra.mxu0 0.0
    %146 = vmatprep.subr.mxu0 0.0
    %147 = vmatpush1.msra.mxu0 0.0
    %148 = vmatprep.subr.mxu0 0.0
    %149 = vmatpush1.msra.mxu0 0.0
    %150 = vmatprep.subr.mxu0 0.0
    %151 = vmatpush1.msra.mxu0 0.0
    %152 = vmatprep.subr.mxu0 0.0
    %153 = vmatpush1.msra.mxu0 0.0
    %154 = vmatprep.subr.mxu0 0.0
    %155 = vmatpush1.msra.mxu0 0.0
    %156 = vmatprep.subr.mxu0 0.0
    %157 = vmatpush1.msra.mxu0 0.0
    %158 = vmatprep.subr.mxu0 0.0
    %159 = vmatpush1.msra.mxu0 0.0
    %160 = vmatprep.subr.mxu0 0.0
    %161 = vmatpush1.msra.mxu0 0.0
    %162 = vmatprep.subr.mxu0 0.0
    %163 = vmatpush1.msra.mxu0 0.0
    %164 = vmatprep.subr.mxu0 0.0
    %165 = vmatpush1.msra.mxu0 0.0
    %166 = vmatprep.mubr.f32.mxu0 0.0
    %167 = vmatmul.mubr.f32.gmra.mrb[0].mxu0 %v84
    %v168 = vpop.f32.mrb[0].mxu0
    %v169 = vadd.f32 0.0, %v168
    %v170 = vpop.f32.mrb[0].mxu0
    %171 = vmatprep.mubr.f32.mxu0 0.0
    %172 = vmatmul.mubr.f32.gmra.mrb[0].mxu0 %v85
    %v173 = vpop.f32.mrb[0].mxu0
    %v174 = vadd.f32 0.0, %v173
    %v175 = vpop.f32.mrb[0].mxu0
    %176 = vdwg.mxu0
    %v177 = vadd.f32 %v82, %v169
    %v178 = vadd.f32 %v83, %v174
    %179 = vst [vmem:[#allocation2] sm:$0xff] %v177
    %180 = vst [vmem:[#allocation2 + $0x8] sm:$0xff] %v178
    // Predicated region
    $region42: #{tpu_custom_call.1} parent=1 // pred_check
      %p181 = pneg %p76
    $region43: #{tpu_custom_call.1} parent=1 // pred_check_branch
      %183 = sbr.rel (%p181) target = $region45
    $region44: #{tpu_custom_call.1} parent=1 // pred_region
      %v184 = vld [vmem:[#allocation8] sm:$0xff]
      %v185 = vld [vmem:[#allocation8 + $0x8] sm:$0xff]
      %v186 = vld [vmem:[#allocation9] sm:$0xff]
      %v187 = vld [vmem:[#allocation9 + $0x8] sm:$0xff]
      %v188 = vld [vmem:[#allocation9 + $0x10] sm:$0xff]
      %v189 = vld [vmem:[#allocation9 + $0x18] sm:$0xff]
      %v190 = vld [vmem:[#allocation9 + $0x20] sm:$0xff]
      %v191 = vld [vmem:[#allocation9 + $0x28] sm:$0xff]
      %v192 = vld [vmem:[#allocation9 + $0x30] sm:$0xff]
      %v193 = vld [vmem:[#allocation9 + $0x38] sm:$0xff]
      %v194 = vld [vmem:[#allocation9 + $0x40] sm:$0xff]
      %v195 = vld [vmem:[#allocation9 + $0x48] sm:$0xff]
      %v196 = vld [vmem:[#allocation9 + $0x50] sm:$0xff]
      %v197 = vld [vmem:[#allocation9 + $0x58] sm:$0xff]
      %v198 = vld [vmem:[#allocation9 + $0x60] sm:$0xff]
      %v199 = vld [vmem:[#allocation9 + $0x68] sm:$0xff]
      %v200 = vld [vmem:[#allocation9 + $0x70] sm:$0xff]
      %v201 = vld [vmem:[#allocation9 + $0x78] sm:$0xff]
      %202 = vmatprep.subr.mxu0 0.0
      %203 = vmatpush1.msra.mxu0 %v186
      %204 = vmatprep.subr.mxu0 0.0
      %205 = vmatpush1.msra.mxu0 %v187
      %206 = vmatprep.subr.mxu0 0.0
      %207 = vmatpush1.msra.mxu0 %v188
      %208 = vmatprep.subr.mxu0 0.0
      %209 = vmatpush1.msra.mxu0 %v189
      %210 = vmatprep.subr.mxu0 0.0
      %211 = vmatpush1.msra.mxu0 %v190
      %212 = vmatprep.subr.mxu0 0.0
      %213 = vmatpush1.msra.mxu0 %v191
      %214 = vmatprep.subr.mxu0 0.0
      %215 = vmatpush1.msra.mxu0 %v192
      %216 = vmatprep.subr.mxu0 0.0
      %217 = vmatpush1.msra.mxu0 %v193
      %218 = vmatprep.subr.mxu0 0.0
      %219 = vmatpush1.msra.mxu0 %v194
      %220 = vmatprep.subr.mxu0 0.0
      %221 = vmatpush1.msra.mxu0 %v195
      %222 = vmatprep.subr.mxu0 0.0
      %223 = vmatpush1.msra.mxu0 %v196
      %224 = vmatprep.subr.mxu0 0.0
      %225 = vmatpush1.msra.mxu0 %v197
      %226 = vmatprep.subr.mxu0 0.0
      %227 = vmatpush1.msra.mxu0 %v198
      %228 = vmatprep.subr.mxu0 0.0
      %229 = vmatpush1.msra.mxu0 %v199
      %230 = vmatprep.subr.mxu0 0.0
      %231 = vmatpush1.msra.mxu0 %v200
      %232 = vmatprep.subr.mxu0 0.0
      %233 = vmatpush1.msra.mxu0 %v201
      %234 = vmatprep.subr.mxu0 0.0
      %235 = vmatpush1.msra.mxu0 0.0
      %236 = vmatprep.subr.mxu0 0.0
      %237 = vmatpush1.msra.mxu0 0.0
      %238 = vmatprep.subr.mxu0 0.0
      %239 = vmatpush1.msra.mxu0 0.0
      %240 = vmatprep.subr.mxu0 0.0
      %241 = vmatpush1.msra.mxu0 0.0
      %242 = vmatprep.subr.mxu0 0.0
      %243 = vmatpush1.msra.mxu0 0.0
      %244 = vmatprep.subr.mxu0 0.0
      %245 = vmatpush1.msra.mxu0 0.0
      %246 = vmatprep.subr.mxu0 0.0
      %247 = vmatpush1.msra.mxu0 0.0
      %248 = vmatprep.subr.mxu0 0.0
      %249 = vmatpush1.msra.mxu0 0.0
      %250 = vmatprep.subr.mxu0 0.0
      %251 = vmatpush1.msra.mxu0 0.0
      %252 = vmatprep.subr.mxu0 0.0
      %253 = vmatpush1.msra.mxu0 0.0
      %254 = vmatprep.subr.mxu0 0.0
      %255 = vmatpush1.msra.mxu0 0.0
      %256 = vmatprep.subr.mxu0 0.0
      %257 = vmatpush1.msra.mxu0 0.0
      %258 = vmatprep.subr.mxu0 0.0
      %259 = vmatpush1.msra.mxu0 0.0
      %260 = vmatprep.subr.mxu0 0.0
      %261 = vmatpush1.msra.mxu0 0.0
      %262 = vmatprep.subr.mxu0 0.0
      %263 = vmatpush1.msra.mxu0 0.0
      %264 = vmatprep.subr.mxu0 0.0
      %265 = vmatpush1.msra.mxu0 0.0
      %266 = vmatprep.mubr.f32.mxu0 0.0
      %267 = vmatmul.mubr.f32.gmra.mrb[0].mxu0 %v184
      %v268 = vpop.f32.mrb[0].mxu0
      %v269 = vadd.f32 0.0, %v268
      %v270 = vpop.f32.mrb[0].mxu0
      %271 = vmatprep.mubr.f32.mxu0 0.0
      %272 = vmatmul.mubr.f32.gmra.mrb[0].mxu0 %v185
      %v273 = vpop.f32.mrb[0].mxu0
      %v274 = vadd.f32 0.0, %v273
      %v275 = vpop.f32.mrb[0].mxu0
      %276 = vdwg.mxu0
      %v277 = vld [vmem:[#allocation2] sm:$0xff]
      %v278 = vld [vmem:[#allocation2 + $0x8] sm:$0xff]
      %v279 = vadd.f32 %v277, %v269
      %v280 = vadd.f32 %v278, %v274
      %v281 = vld [vmem:[%s2] sm:$0x1]
      %v283 = vlaneseq
      %v284 = vshrl.u32 %v283, 7
      %v285 = vsub.s32 0, %v284
      %v286 = vrot.slane %v281, %v285
      %v288 = vadd.f32 %v279, %v286
      %v289 = vadd.f32 %v280, %v286
      %290 = vst [vmem:[#allocation11] sm:$0xff] %v288
      %291 = vst [vmem:[#allocation11 + $0x8] sm:$0xff] %v289
    $region45: #{tpu_custom_call.1} parent=1 // pred_fallthru
      _
    // Predicated region
    $region46: #{tpu_custom_call.1} parent=1 // pred_check
      _
    $region47: #{tpu_custom_call.1} parent=1 // pred_check_branch
      %293 = sbr.rel (0) target = $region49
    $region48: #{tpu_custom_call.1} parent=1 // pred_region
      %s295 = ssub.s32 256, 256
      %296 = vsyncadd [#allocation5], %s295
      %s297 = sshll.u32 [#allocation11], 4
      %s298 = int_to_ptr.vmem [resolvable:$true] %s297
      %303 = dma.vmem_to_hbm [thread:$0]  %s298, 256, %s5, [#allocation5], 128, 128, 8
    $region49: #{tpu_custom_call.1} parent=1 // pred_fallthru
      _
    // Predicated region
    $region50: #{tpu_custom_call.1} parent=1 // pred_check
      _
    $region51: #{tpu_custom_call.1} parent=1 // pred_check_branch
      %305 = sbr.rel (0) target = $region53
    $region52: #{tpu_custom_call.1} parent=1 // pred_region
      %306 = dma.done [#allocation5], 256
    $region53: #{tpu_custom_call.1} parent=1 // pred_fallthru
      _
    %307 = vsyncpa [#allocation4], 1
    %308 = vsyncpa [#allocation7], 1
    %309 = vsyncpa [#allocation10], 1
    %310 = vsyncpa [#allocation5], 1

</llo_original>
